<compile_context>
chip_gen: v6e
topology: v6e:2x2x1
jax: 0.10.0
libtpu: 0.0.40
codegen_flags: <defaults>
</compile_context>

<pallas_src>
import jax
import jax.numpy as jnp
from jax.experimental import pallas as pl
from jax.experimental.pallas import tpu as pltpu

_LANES = 128
_SUBL = 8
_TILE = _SUBL * _LANES        # 1024: element alignment that avoids any pad copy
_MIN_BLOCK_ROWS = 256         # multiple of 8/16/32 -> legal block for f32/bf16/int8
_SUB_ROWS = 256               # fori_loop sub-chunk: 128 KiB per input per iteration


def _cdiv(a, b):
    return -(-a // b)


def _round_up(a, b):
    return _cdiv(a, b) * b


def _choose_blocking(rows, requested_rows):
    """Pick (block_rows, num_chunks).

    block_rows is a multiple of 256 (legal for any input dtype and divisible by
    the 256-row sub-chunk) unless the whole array fits in one minimum block, in
    which case the block simply covers the full array.  When the array spans at
    least two minimum blocks we force num_chunks >= 2 so the "parallel" grid
    axis feeds both TensorCores on v7x.
    """
    if rows <= _MIN_BLOCK_ROWS:
        return rows, 1
    req = max(_MIN_BLOCK_ROWS, (int(requested_rows) // _MIN_BLOCK_ROWS) * _MIN_BLOCK_ROWS)
    num_chunks = _cdiv(rows, req)
    if num_chunks == 1:
        num_chunks = 2
    block_rows = _round_up(_cdiv(rows, num_chunks), _MIN_BLOCK_ROWS)
    block_rows = min(block_rows, (rows // _MIN_BLOCK_ROWS) * _MIN_BLOCK_ROWS)
    return block_rows, _cdiv(rows, block_rows)


def _make_kernel(block_rows, n_valid, need_mask, num_chunks, approx_recip):
    """Build the per-block partial-sum kernel (all arguments are static)."""
    sub_rows = min(_SUB_ROWS, block_rows)
    assert block_rows % sub_rows == 0
    n_iters = block_rows // sub_rows
    unroll = 2 if n_iters >= 2 else 1

    def kernel(x_ref, t_ref, o_ref):

        def run_block(masked):
            if masked:
                # Hoisted once per block; per-iteration cost is one add + cmp.
                row0 = pl.program_id(0) * block_rows
                row_iota = jax.lax.broadcasted_iota(jnp.int32, (sub_rows, _LANES), 0)
                lane_iota = jax.lax.broadcasted_iota(jnp.int32, (sub_rows, _LANES), 1)
                base_idx = (row_iota + row0) * _LANES + lane_iota

            def body(c, carry):
                a_pt, a_p, a_t, a_b = carry
                r0 = pl.multiple_of(c * sub_rows, sub_rows)
                x = x_ref[pl.ds(r0, sub_rows), :].astype(jnp.float32)
                t = t_ref[pl.ds(r0, sub_rows), :].astype(jnp.float32)
                if masked:
                    valid = (base_idx + c * (sub_rows * _LANES)) < n_valid
                    # Masked logits -> p == 0 and bce == 0 exactly; masked
                    # targets -> 0.  Garbage (even NaN) never enters the sums.
                    x = jnp.where(valid, x, -1e30)
                    t = jnp.where(valid, t, 0.0)

                m = jnp.maximum(x, 0.0)
                e = jnp.exp(x - 2.0 * m)                  # exp(-|x|)
                d = 1.0 + e
                p = jnp.where(x >= 0.0, 1.0, e) * pl.reciprocal(d, approx=approx_recip)
                bce = (m - x * t) + jnp.log(d)

                def red(v):
                    # (sub_rows,128) -> (8,128): elementwise VPU adds across
                    # vregs, no cross-lane/sublane XLU work in the hot loop.
                    return v.reshape(-1, _SUBL, _LANES).sum(axis=0)

                return (a_pt + red(p * t), a_p + red(p), a_t + red(t), a_b + red(bce))

            zero = jnp.zeros((_SUBL, _LANES), jnp.float32)
            a_pt, a_p, a_t, a_b = jax.lax.fori_loop(
                0, n_iters, body, (zero, zero, zero, zero), unroll=unroll)
            o_ref[0, 0 * _SUBL:1 * _SUBL, :] = a_pt     # intersection partial
            o_ref[0, 1 * _SUBL:2 * _SUBL, :] = a_p      # sum(p) partial
            o_ref[0, 2 * _SUBL:3 * _SUBL, :] = a_t      # sum(t) partial
            o_ref[0, 3 * _SUBL:4 * _SUBL, :] = a_b      # sum(bce) partial

        if not need_mask:
            run_block(False)
        elif num_chunks == 1:
            run_block(True)
        else:
            # Masking is only ever required in the last grid block; keep the
            # hot path select-free on all other blocks.
            is_last = pl.program_id(0) == num_chunks - 1

            @pl.when(is_last)
            def _():
                run_block(True)

            @pl.when(jnp.logical_not(is_last))
            def _():
                run_block(False)

    return kernel


def dice_bce_loss(inputs, targets, smooth_size=1.0, block_rows=4096,
                  approx_reciprocal=True):
    """Pallas implementation of DiceBCELoss.forward(inputs, targets, smooth_size).

    `block_rows` ~4096 suits all generations at the default 32 MiB VMEM limit;
    v7x users chasing the last few % can raise it to 8192.  Set
    `approx_reciprocal=False` on HBM-bound chips (v5e/v6e) for a free accuracy
    bump; keep True on v7x where VALU/EUP is the binding slot.
    """
    n_total = inputs.size
    assert targets.size == n_total

    x = inputs.reshape(-1)
    t = targets.reshape(-1)

    n_pad = _round_up(n_total, _TILE)
    if n_pad != n_total:
        # Only sizes not divisible by 1024 pay this copy (< 1024 pad elements);
        # aligned inputs stream straight from their original HBM buffers.
        # TODO(synk): a fully copy-free path for unaligned sizes needs 1-D
        # blocks / manual DMA; not worth it for a sub-4KiB tail.
        x = jnp.pad(x, (0, n_pad - n_total))
        t = jnp.pad(t, (0, n_pad - n_total))

    rows = n_pad // _LANES
    blk_rows, num_chunks = _choose_blocking(rows, block_rows)
    need_mask = (n_pad != n_total) or (rows % blk_rows != 0)

    x2 = x.reshape(rows, _LANES)
    t2 = t.reshape(rows, _LANES)

    kernel = _make_kernel(blk_rows, n_total, need_mask, num_chunks, approx_reciprocal)

    partials = pl.pallas_call(
        kernel,
        out_shape=jax.ShapeDtypeStruct((num_chunks, 4 * _SUBL, _LANES), jnp.float32),
        grid_spec=pltpu.PrefetchScalarGridSpec(
            num_scalar_prefetch=0,
            grid=(num_chunks,),
            in_specs=[
                pl.BlockSpec((blk_rows, _LANES), lambda i: (i, 0)),
                pl.BlockSpec((blk_rows, _LANES), lambda i: (i, 0)),
            ],
            out_specs=pl.BlockSpec((1, 4 * _SUBL, _LANES), lambda i: (i, 0, 0)),
        ),
        compiler_params=pltpu.CompilerParams(
            dimension_semantics=("parallel",),
            vmem_limit_bytes=32 * 1024 * 1024,
        ),
    )(x2, t2)

    # Tiny finalize outside the kernel: reduce the lane-dense per-chunk partials
    # to four scalars and assemble the loss.
    sums = partials.reshape(num_chunks, 4, _SUBL, _LANES).sum(axis=(0, 2, 3))
    inter, psum, tsum, bsum = sums[0], sums[1], sums[2], sums[3]
    smooth = jnp.float32(smooth_size)
    dice_loss = 1.0 - (2.0 * inter + smooth) / (psum + tsum + smooth)
    bce_mean = bsum / jnp.float32(n_total)
    return bce_mean + dice_loss


def _reference(inputs, targets, smooth_size=1.0):
    """Pure-JAX reference matching the PyTorch module (clamped BCE logs)."""
    p = jax.nn.sigmoid(inputs.astype(jnp.float32)).reshape(-1)
    t = targets.reshape(-1).astype(jnp.float32)
    inter = jnp.sum(p * t)
    dice = 1.0 - (2.0 * inter + smooth_size) / (jnp.sum(p) + jnp.sum(t) + smooth_size)
    bce = -jnp.mean(t * jnp.maximum(jnp.log(p), -100.0)
                    + (1.0 - t) * jnp.maximum(jnp.log(1.0 - p), -100.0))
    return bce + dice


if __name__ == "__main__":
    key = jax.random.PRNGKey(0)
    k1, k2, k3, k4, k5, k6 = jax.random.split(key, 6)

    # 1) Segmentation-style aligned shape (2048 elems): no pad, no mask, 1 chunk.
    x = jax.random.normal(k1, (2, 4, 16, 16), dtype=jnp.float32)
    t = jax.random.bernoulli(k2, 0.5, (2, 4, 16, 16)).astype(jnp.float32)
    loss = dice_bce_loss(x, t, smooth_size=1.0)
    jax.block_until_ready(loss)
    ref = _reference(x, t, 1.0)
    assert jnp.allclose(loss, ref, rtol=2e-3, atol=2e-3), (loss, ref)

    # 2) Non-tile-aligned size (1938 elems): exercises the masked tail path.
    x_b = jax.random.normal(k3, (2, 3, 17, 19), dtype=jnp.float32)
    t_b = jax.random.bernoulli(k4, 0.3, (2, 3, 17, 19)).astype(jnp.float32)
    loss_b = dice_bce_loss(x_b, t_b, smooth_size=1.0)
    jax.block_until_ready(loss_b)
    ref_b = _reference(x_b, t_b, 1.0)
    assert jnp.allclose(loss_b, ref_b, rtol=2e-3, atol=2e-3), (loss_b, ref_b)

    # 3) Larger aligned shape (131072 elems): multi-chunk grid + multi-iteration
    #    fused fori_loop accumulation, still no pad / no mask.
    x_c = jax.random.normal(k5, (2, 16, 64, 64), dtype=jnp.float32)
    t_c = jax.random.bernoulli(k6, 0.4, (2, 16, 64, 64)).astype(jnp.float32)
    loss_c = dice_bce_loss(x_c, t_c, smooth_size=1.0)
    jax.block_until_ready(loss_c)
    ref_c = _reference(x_c, t_c, 1.0)
    assert jnp.allclose(loss_c, ref_c, rtol=2e-3, atol=2e-3), (loss_c, ref_c)

    print("KERNEL_OK")
</pallas_src>

<mosaic_0001>
module attributes {stable_mosaic.version = 11 : i64} {
  func.func @kernel(%arg0: i32, %arg1: memref<16x128xf32, #tpu.memory_space<vmem>>, %arg2: memref<16x128xf32, #tpu.memory_space<vmem>>, %arg3: memref<1x32x128xf32, #tpu.memory_space<vmem>>) attributes {dimension_semantics = [#tpu.dimension_semantics<parallel>], iteration_bounds = array<i64: 1>, scalar_prefetch = 0 : i64, scratch_operands = 0 : i64, tpu.core_type = #tpu.core_type<tc>, window_params = [{transform_indices = @transform_0, window_bounds = array<i64: 16, 128>}, {transform_indices = @transform_1, window_bounds = array<i64: 16, 128>}, {transform_indices = @transform_2, window_bounds = array<i64: 1, 32, 128>}]} {
    %cst = arith.constant 0.000000e+00 : f32
    %0 = vector.broadcast %cst : f32 to vector<8x128xf32>
    %c0_i32 = arith.constant 0 : i32
    %c16_i32 = arith.constant 16 : i32
    %1 = arith.muli %c0_i32, %c16_i32 : i32
    %2 = tpu.assume_multiple %1, 16 : i32
    %3 = arith.index_cast %2 : i32 to index
    %c0 = arith.constant 0 : index
    %4 = vector.load %arg1[%3, %c0] : memref<16x128xf32, #tpu.memory_space<vmem>>, vector<16x128xf32>
    %5 = arith.index_cast %2 : i32 to index
    %c0_0 = arith.constant 0 : index
    %6 = vector.load %arg2[%5, %c0_0] : memref<16x128xf32, #tpu.memory_space<vmem>>, vector<16x128xf32>
    %cst_1 = arith.constant 0.000000e+00 : f32
    %7 = vector.broadcast %cst_1 : f32 to vector<16x128xf32>
    %8 = arith.maximumf %4, %7 : vector<16x128xf32>
    %cst_2 = arith.constant 2.000000e+00 : f32
    %9 = vector.broadcast %cst_2 : f32 to vector<16x128xf32>
    %10 = arith.mulf %9, %8 : vector<16x128xf32>
    %11 = arith.subf %4, %10 : vector<16x128xf32>
    %12 = math.exp %11 : vector<16x128xf32>
    %cst_3 = arith.constant 1.000000e+00 : f32
    %13 = vector.broadcast %cst_3 : f32 to vector<16x128xf32>
    %14 = arith.addf %13, %12 : vector<16x128xf32>
    %cst_4 = arith.constant 0.000000e+00 : f32
    %15 = vector.broadcast %cst_4 : f32 to vector<16x128xf32>
    %16 = arith.cmpf oge, %4, %15 : vector<16x128xf32>
    %cst_5 = arith.constant 1.000000e+00 : f32
    %17 = vector.broadcast %cst_5 : f32 to vector<16x128xf32>
    %18 = arith.select %16, %17, %12 : vector<16x128xi1>, vector<16x128xf32>
    %19 = tpu.reciprocal %14 {approx = true} : vector<16x128xf32> -> vector<16x128xf32>
    %20 = arith.mulf %18, %19 : vector<16x128xf32>
    %21 = arith.mulf %4, %6 : vector<16x128xf32>
    %22 = arith.subf %8, %21 : vector<16x128xf32>
    %23 = math.log %14 : vector<16x128xf32>
    %24 = arith.addf %22, %23 : vector<16x128xf32>
    %25 = arith.mulf %20, %6 : vector<16x128xf32>
    %26 = vector.shape_cast %25 : vector<16x128xf32> to vector<2x8x128xf32>
    %cst_6 = arith.constant dense<0.000000e+00> : vector<8x128xf32>
    %27 = vector.multi_reduction <add>, %26, %cst_6 [0] : vector<2x8x128xf32> to vector<8x128xf32>
    %28 = arith.addf %0, %27 : vector<8x128xf32>
    %29 = vector.shape_cast %20 : vector<16x128xf32> to vector<2x8x128xf32>
    %cst_7 = arith.constant dense<0.000000e+00> : vector<8x128xf32>
    %30 = vector.multi_reduction <add>, %29, %cst_7 [0] : vector<2x8x128xf32> to vector<8x128xf32>
    %31 = arith.addf %0, %30 : vector<8x128xf32>
    %32 = vector.shape_cast %6 : vector<16x128xf32> to vector<2x8x128xf32>
    %cst_8 = arith.constant dense<0.000000e+00> : vector<8x128xf32>
    %33 = vector.multi_reduction <add>, %32, %cst_8 [0] : vector<2x8x128xf32> to vector<8x128xf32>
    %34 = arith.addf %0, %33 : vector<8x128xf32>
    %35 = vector.shape_cast %24 : vector<16x128xf32> to vector<2x8x128xf32>
    %cst_9 = arith.constant dense<0.000000e+00> : vector<8x128xf32>
    %36 = vector.multi_reduction <add>, %35, %cst_9 [0] : vector<2x8x128xf32> to vector<8x128xf32>
    %37 = arith.addf %0, %36 : vector<8x128xf32>
    %c1_i32 = arith.constant 1 : i32
    %c0_10 = arith.constant 0 : index
    %c0_11 = arith.constant 0 : index
    %c0_12 = arith.constant 0 : index
    %38 = vector.load %arg3[%c0_10, %c0_11, %c0_12] : memref<1x32x128xf32, #tpu.memory_space<vmem>>, vector<1x8x128xf32>
    %39 = vector.shape_cast %38 : vector<1x8x128xf32> to vector<8x128xf32>
    %40 = vector.shape_cast %28 : vector<8x128xf32> to vector<1x8x128xf32>
    tpu.vector_store %arg3[%c0_10, %c0_11, %c0_12], %40 {strides = array<i32>} : memref<1x32x128xf32, #tpu.memory_space<vmem>>, vector<1x8x128xf32>,
    %c0_13 = arith.constant 0 : index
    %c8 = arith.constant 8 : index
    %c0_14 = arith.constant 0 : index
    %41 = vector.load %arg3[%c0_13, %c8, %c0_14] : memref<1x32x128xf32, #tpu.memory_space<vmem>>, vector<1x8x128xf32>
    %42 = vector.shape_cast %41 : vector<1x8x128xf32> to vector<8x128xf32>
    %43 = vector.shape_cast %31 : vector<8x128xf32> to vector<1x8x128xf32>
    tpu.vector_store %arg3[%c0_13, %c8, %c0_14], %43 {strides = array<i32>} : memref<1x32x128xf32, #tpu.memory_space<vmem>>, vector<1x8x128xf32>,
    %c0_15 = arith.constant 0 : index
    %c16 = arith.constant 16 : index
    %c0_16 = arith.constant 0 : index
    %44 = vector.load %arg3[%c0_15, %c16, %c0_16] : memref<1x32x128xf32, #tpu.memory_space<vmem>>, vector<1x8x128xf32>
    %45 = vector.shape_cast %44 : vector<1x8x128xf32> to vector<8x128xf32>
    %46 = vector.shape_cast %34 : vector<8x128xf32> to vector<1x8x128xf32>
    tpu.vector_store %arg3[%c0_15, %c16, %c0_16], %46 {strides = array<i32>} : memref<1x32x128xf32, #tpu.memory_space<vmem>>, vector<1x8x128xf32>,
    %c0_17 = arith.constant 0 : index
    %c24 = arith.constant 24 : index
    %c0_18 = arith.constant 0 : index
    %47 = vector.load %arg3[%c0_17, %c24, %c0_18] : memref<1x32x128xf32, #tpu.memory_space<vmem>>, vector<1x8x128xf32>
    %48 = vector.shape_cast %47 : vector<1x8x128xf32> to vector<8x128xf32>
    %49 = vector.shape_cast %37 : vector<8x128xf32> to vector<1x8x128xf32>
    tpu.vector_store %arg3[%c0_17, %c24, %c0_18], %49 {strides = array<i32>} : memref<1x32x128xf32, #tpu.memory_space<vmem>>, vector<1x8x128xf32>,
    return
  }
  func.func @transform_0(%arg0: i32) -> (i32, i32) {
    %c0_i32 = arith.constant 0 : i32
    %c0_i32_0 = arith.constant 0 : i32
    return %arg0, %c0_i32 : i32, i32
  }
  func.func @transform_1(%arg0: i32) -> (i32, i32) {
    %c0_i32 = arith.constant 0 : i32
    %c0_i32_0 = arith.constant 0 : i32
    return %arg0, %c0_i32 : i32, i32
  }
  func.func @transform_2(%arg0: i32) -> (i32, i32, i32) {
    %c0_i32 = arith.constant 0 : i32
    %c0_i32_0 = arith.constant 0 : i32
    %c0_i32_1 = arith.constant 0 : i32
    return %arg0, %c0_i32, %c0_i32_0 : i32, i32, i32
  }
}

</mosaic_0001>

<llo_original>
// kernel: tpu_custom_call.1
$region0: #{tpu_custom_call.1}
  #allocation0 [shape = 'u32[]', space=smem, size = 0x4, offset = 0x4, fixed_abs, tag = 'smem constant byte address 0x4 - core index']
  #allocation1 [shape = 'u32[144,128]{1,0:T(1,128)}', space=vmem, size = 0x12000, scoped, tag = 'internal scratch']
  %s0 = inlined_call_operand.hbm [shape: f32[16,128], index: 0, kind: input, shape index: {}]
  %s1 = inlined_call_operand.hbm [shape: f32[16,128], index: 1, kind: input, shape index: {}]
  %s2 = inlined_call_operand.hbm [shape: f32[1,32,128], index: 2, kind: output, shape index: {}]
  %s3 = sld [smem:[#allocation0]]
  $region26: #{tpu_custom_call.1} parent=0
    _
  %s5 = ssub.s32 1, %s3
  %s6 = scalar_select 0, %s5, %s3
  $region1: #{tpu_custom_call.1} parent=0
    #allocation2 [shape = 'u8[8192]{0}', space=vmem, size = 0x2000, scoped, tag = 'input window, operand 0, single buffered']
    #allocation3 [shape = 's32[1]{0}', space=sflag, size = 0x4, scoped, tag = 'scoped memory for tpu_custom_call.1']
    #allocation4 [shape = 's32[1]{0}', space=sflag, size = 0x4, scoped, tag = 'scoped memory for tpu_custom_call.1']
    #allocation5 [shape = 'u8[8192]{0}', space=vmem, size = 0x2000, scoped, tag = 'input window, operand 1, single buffered']
    #allocation6 [shape = 's32[1]{0}', space=sflag, size = 0x4, scoped, tag = 'scoped memory for tpu_custom_call.1']
    #allocation7 [shape = 'u8[16384]{0}', space=vmem, size = 0x4000, scoped, tag = 'output window, operand 0, single buffered']
    %7 = vsyncpa [#allocation3], 0
    %8 = vsyncpa [#allocation6], 0
    %9 = vsyncpa [#allocation4], 0
    // Predicated region
    $region2: #{tpu_custom_call.1} parent=1 // pred_check
      _
    $region3: #{tpu_custom_call.1} parent=1 // pred_check_branch
      %11 = sbr.rel (0) target = $region5
    $region4: #{tpu_custom_call.1} parent=1 // pred_region
      %s13 = ssub.s32 256, 256
      %14 = vsyncadd [#allocation3], %s13
      %s15 = sshll.u32 [#allocation2], 4
      %s16 = int_to_ptr.vmem [resolvable:$true] %s15
      %21 = dma.hbm_to_vmem [thread:$0]  %s0, 256, %s16, [#allocation3], 128, 128, 8
    $region5: #{tpu_custom_call.1} parent=1 // pred_fallthru
      _
    // Predicated region
    $region6: #{tpu_custom_call.1} parent=1 // pred_check
      _
    $region7: #{tpu_custom_call.1} parent=1 // pred_check_branch
      %23 = sbr.rel (0) target = $region9
    $region8: #{tpu_custom_call.1} parent=1 // pred_region
      %s25 = ssub.s32 256, 256
      %26 = vsyncadd [#allocation6], %s25
      %s27 = sshll.u32 [#allocation5], 4
      %s28 = int_to_ptr.vmem [resolvable:$true] %s27
      %33 = dma.hbm_to_vmem [thread:$0]  %s1, 256, %s28, [#allocation6], 128, 128, 8
    $region9: #{tpu_custom_call.1} parent=1 // pred_fallthru
      _
    // Predicated region
    $region10: #{tpu_custom_call.1} parent=1 // pred_check
      _
    $region11: #{tpu_custom_call.1} parent=1 // pred_check_branch
      %35 = sbr.rel (0) target = $region13
    $region12: #{tpu_custom_call.1} parent=1 // pred_region
      %36 = dma.done [#allocation3], 256
    $region13: #{tpu_custom_call.1} parent=1 // pred_fallthru
      _
    // Predicated region
    $region14: #{tpu_custom_call.1} parent=1 // pred_check
      _
    $region15: #{tpu_custom_call.1} parent=1 // pred_check_branch
      %38 = sbr.rel (0) target = $region17
    $region16: #{tpu_custom_call.1} parent=1 // pred_region
      %39 = dma.done [#allocation6], 256
    $region17: #{tpu_custom_call.1} parent=1 // pred_fallthru
      _
    %v40 = vld [vmem:[#allocation2] sm:$0xff]
    %v41 = vld [vmem:[#allocation2 + $0x8] sm:$0xff]
    %v42 = vld [vmem:[#allocation5] sm:$0xff]
    %v43 = vld [vmem:[#allocation5 + $0x8] sm:$0xff]
    %v44 = vmax.f32 %v40, 0.0
    %v45 = vmax.f32 %v41, 0.0
    %v46 = vmul.f32 %v44, 2.0
    %v47 = vmul.f32 %v45, 2.0
    %v48 = vsub.f32 %v40, %v46
    %v49 = vsub.f32 %v41, %v47
    %v50 = vmul.f32 %v48, 1.442695
    %v51 = vpow.pop %v50
    %v52 = vmul.f32 %v49, 1.442695
    %v53 = vpow.pop %v52
    %v54 = vadd.f32 %v51, 1.0
    %v55 = vadd.f32 %v53, 1.0
    %vm56 = vcmp.ge.f32.partialorder %v40, 0.0
    %vm57 = vcmp.ge.f32.partialorder %v41, 0.0
    %v58 = vsel %vm56, 1.0, %v51
    %v59 = vsel %vm57, 1.0, %v53
    %v60 = vrcp.pop %v54
    %v61 = vrcp.pop %v55
    %v62 = vmul.f32 %v58, %v60
    %v63 = vmul.f32 %v59, %v61
    %v64 = vmul.f32 %v40, %v42
    %v65 = vmul.f32 %v41, %v43
    %v66 = vsub.f32 %v44, %v64
    %v67 = vsub.f32 %v45, %v65
    %v68 = vlog2.pop %v54
    %v69 = vmul.f32 %v68, 0.6931472
    %v70 = vlog2.pop %v55
    %v71 = vmul.f32 %v70, 0.6931472
    %v72 = vadd.f32 %v66, %v69
    %v73 = vadd.f32 %v67, %v71
    %v74 = vmul.f32 %v62, %v42
    %v75 = vmul.f32 %v63, %v43
    %v76 = vadd.f32 %v74, %v75
    %v77 = vadd.f32 %v76, 0.0
    %v78 = vadd.f32 %v62, %v63
    %v79 = vadd.f32 %v78, 0.0
    %v80 = vadd.f32 %v42, %v43
    %v81 = vadd.f32 %v80, 0.0
    %v82 = vadd.f32 %v72, %v73
    %v83 = vadd.f32 %v82, 0.0
    %84 = vst [vmem:[#allocation7] sm:$0xff] %v77
    %85 = vst [vmem:[#allocation7 + $0x8] sm:$0xff] %v79
    %86 = vst [vmem:[#allocation7 + $0x10] sm:$0xff] %v81
    %87 = vst [vmem:[#allocation7 + $0x18] sm:$0xff] %v83
    // Predicated region
    $region18: #{tpu_custom_call.1} parent=1 // pred_check
      _
    $region19: #{tpu_custom_call.1} parent=1 // pred_check_branch
      %89 = sbr.rel (0) target = $region21
    $region20: #{tpu_custom_call.1} parent=1 // pred_region
      %s91 = ssub.s32 512, 512
      %92 = vsyncadd [#allocation4], %s91
      %s93 = sshll.u32 [#allocation7], 4
      %s94 = int_to_ptr.vmem [resolvable:$true] %s93
      %99 = dma.vmem_to_hbm [thread:$0]  %s94, 512, %s2, [#allocation4], 128, 128, 8
    $region21: #{tpu_custom_call.1} parent=1 // pred_fallthru
      _
    // Predicated region
    $region22: #{tpu_custom_call.1} parent=1 // pred_check
      _
    $region23: #{tpu_custom_call.1} parent=1 // pred_check_branch
      %101 = sbr.rel (0) target = $region25
    $region24: #{tpu_custom_call.1} parent=1 // pred_region
      %102 = dma.done [#allocation4], 512
    $region25: #{tpu_custom_call.1} parent=1 // pred_fallthru
      _
    %103 = vsyncpa [#allocation3], 1
    %104 = vsyncpa [#allocation6], 1
    %105 = vsyncpa [#allocation4], 1

</llo_original>
